<compile_context>
chip_gen: v6e
topology: v6e:2x2x1
jax: 0.10.0
libtpu: 0.0.40
codegen_flags: <defaults>
</compile_context>

<pallas_src>
import jax
import jax.numpy as jnp
from jax.experimental import pallas as pl
from jax.experimental.pallas import tpu as pltpu


def _conv_gemm_kernel(x_ref, w_ref, b_ref, o_ref):
    """One M-tile of the im2col GEMM.

    x_ref : (TM, 9*Cin)    bf16 im2col patches
    w_ref : (9*Cin, Cout)  bf16 repacked conv weights (resident)
    b_ref : (1, Cout)      f32 bias (resident)
    o_ref : (TM, Cout)     f32 conv output rows
    """
    acc = jnp.dot(x_ref[...], w_ref[...], preferred_element_type=jnp.float32)
    o_ref[...] = (acc + b_ref[...]).astype(o_ref.dtype)


def _round_up(x, m):
    return (x + m - 1) // m * m


def _pick_tile_m(m_total, cout):
    """Largest M-tile that (a) divides M, (b) keeps the f32 accumulator small
    enough for the vreg file (~128 KiB), (c) leaves >= 4 grid steps when possible."""
    cap = (128 * 1024) // (4 * max(_round_up(cout, 128), 128))
    cap -= cap % 8
    cap = max(8, min(512, cap))
    if m_total % 8 != 0:
        return m_total                      # degenerate tiny case: single block
    best = None
    tm = min(cap, m_total)
    tm -= tm % 8
    while tm >= 8:
        if m_total % tm == 0:
            if m_total // tm >= 4:
                return tm
            if best is None:
                best = tm
        tm -= 8
    return best if best is not None else m_total


def upscale_module_forward(x_nchw, weight, bias, scale_factor=4):
    """Forward of UpscaleModule: Conv2d(Cin -> Cin*r^2, 3x3, pad=1) + PixelShuffle(r).

    x_nchw : (N, Cin, H, W)  f32, PyTorch NCHW layout
    weight : (Cout, Cin, 3, 3) with Cout = Cin * r^2
    bias   : (Cout,)
    returns: (N, Cin, H*r, W*r)  NCHW, identical semantics to the PyTorch module.
    """
    N, Cin, H, W = x_nchw.shape
    r = scale_factor
    Cout = Cin * r * r
    K = 9 * Cin
    assert weight.shape == (Cout, Cin, 3, 3)

    # ---- XLA glue: layout, zero-pad, im2col pre-pack, bf16 cast ------------
    x_nhwc = jnp.transpose(x_nchw, (0, 2, 3, 1))                    # (N,H,W,Cin)
    x_pad = jnp.pad(x_nhwc, ((0, 0), (1, 1), (1, 1), (0, 0)))       # (N,H+2,W+2,Cin)
    taps = [x_pad[:, dy:dy + H, dx:dx + W, :]
            for dy in range(3) for dx in range(3)]                  # 9 x (N,H,W,Cin)
    patches = jnp.stack(taps, axis=3)                               # (N,H,W,9,Cin)
    patches = patches.reshape(N * H * W, K).astype(jnp.bfloat16)    # (M, K)

    # (Cout,Cin,3,3) -> (3,3,Cin,Cout) -> (K,Cout); row idx = (dy*3+dx)*Cin + ci
    w_mat = jnp.transpose(weight, (2, 3, 1, 0)).reshape(K, Cout).astype(jnp.bfloat16)
    b2d = bias.reshape(1, Cout).astype(jnp.float32)

    M = N * H * W
    tm = _pick_tile_m(M, Cout)
    grid = (M // tm,)

    # ---- explicit scoped-VMEM budget: 2x(in tile + out tile) + params ------
    in_tile = _round_up(tm, 8) * _round_up(K, 128) * 2              # bf16
    out_tile = _round_up(tm, 8) * _round_up(Cout, 128) * 4          # f32
    w_bytes = _round_up(K, 16) * _round_up(Cout, 128) * 2
    b_bytes = 8 * _round_up(Cout, 128) * 4
    need = 2 * (in_tile + out_tile) + 2 * (w_bytes + b_bytes)
    vmem_limit = int(min(max(2 * need + (8 << 20), 32 << 20), 112 << 20))

    conv_flat = pl.pallas_call(
        _conv_gemm_kernel,
        out_shape=jax.ShapeDtypeStruct((M, Cout), jnp.float32),
        grid_spec=pltpu.PrefetchScalarGridSpec(
            num_scalar_prefetch=0,
            grid=grid,
            in_specs=[
                pl.BlockSpec((tm, K), lambda m: (m, 0)),
                pl.BlockSpec((K, Cout), lambda m: (0, 0)),          # resident weights
                pl.BlockSpec((1, Cout), lambda m: (0, 0)),          # resident bias
            ],
            out_specs=pl.BlockSpec((tm, Cout), lambda m: (m, 0)),
        ),
        compiler_params=pltpu.CompilerParams(
            dimension_semantics=("parallel",),
            vmem_limit_bytes=vmem_limit,
        ),
    )(patches, w_mat, b2d)

    # ---- PixelShuffle: pure layout plumbing, stays in XLA -------------------
    # TODO(synk): fold this transpose into the kernel's output write (would need
    # a lane-changing in-kernel transpose) to avoid one extra HBM pass over the
    # r^2-sized output tensor.
    ps = conv_flat.reshape(N, H, W, Cin, r, r)
    ps = jnp.transpose(ps, (0, 3, 1, 4, 2, 5))                      # (N,Cin,H,r,W,r)
    return ps.reshape(N, Cin, H * r, W * r)


def _reference_forward(x_nchw, weight, bias, scale_factor=4, bf16_operands=False):
    """Pure-JAX reference (lax conv) for numerical verification."""
    N, Cin, H, W = x_nchw.shape
    r = scale_factor
    x_nhwc = jnp.transpose(x_nchw, (0, 2, 3, 1))
    w_hwio = jnp.transpose(weight, (2, 3, 1, 0))                    # (3,3,Cin,Cout)
    if bf16_operands:
        x_nhwc = x_nhwc.astype(jnp.bfloat16).astype(jnp.float32)
        w_hwio = w_hwio.astype(jnp.bfloat16).astype(jnp.float32)
    conv = jax.lax.conv_general_dilated(
        x_nhwc, w_hwio, window_strides=(1, 1), padding="SAME",
        dimension_numbers=("NHWC", "HWIO", "NHWC"),
    ) + bias
    ps = conv.reshape(N, H, W, Cin, r, r)
    ps = jnp.transpose(ps, (0, 3, 1, 4, 2, 5))
    return ps.reshape(N, Cin, H * r, W * r)


if __name__ == "__main__":
    key = jax.random.PRNGKey(0)
    k_x, k_w, k_b = jax.random.split(key, 3)

    N, Cin, H, W = 2, 4, 16, 16
    scale = 4
    Cout = Cin * scale * scale

    x = jax.random.normal(k_x, (N, Cin, H, W), dtype=jnp.float32)
    fan_in = Cin * 3 * 3
    weight = jax.random.normal(k_w, (Cout, Cin, 3, 3), dtype=jnp.float32) * (1.0 / fan_in) ** 0.5
    bias = jax.random.normal(k_b, (Cout,), dtype=jnp.float32) * 0.01

    out = jax.block_until_ready(
        upscale_module_forward(x, weight, bias, scale_factor=scale))
    assert out.shape == (N, Cin, H * scale, W * scale), out.shape

    # bf16-consistent reference (same operand quantization as the kernel).
    ref_bf16 = _reference_forward(x, weight, bias, scale_factor=scale, bf16_operands=True)
    err = float(jnp.max(jnp.abs(out - ref_bf16)))
    assert jnp.allclose(out, ref_bf16, atol=2e-3, rtol=2e-3), err

    # loose sanity check vs the exact f32 reference (bf16 operand rounding only).
    ref_f32 = _reference_forward(x, weight, bias, scale_factor=scale)
    err32 = float(jnp.max(jnp.abs(out - ref_f32)))
    assert jnp.allclose(out, ref_f32, atol=5e-2, rtol=5e-2), err32

    print("KERNEL_OK")
</pallas_src>

<mosaic_0001>
module attributes {stable_mosaic.version = 11 : i64} {
  func.func @_conv_gemm_kernel(%arg0: i32, %arg1: memref<128x36xbf16, #tpu.memory_space<vmem>>, %arg2: memref<36x64xbf16, #tpu.memory_space<vmem>>, %arg3: memref<1x64xf32, #tpu.memory_space<vmem>>, %arg4: memref<128x64xf32, #tpu.memory_space<vmem>>) attributes {dimension_semantics = [#tpu.dimension_semantics<parallel>], iteration_bounds = array<i64: 4>, scalar_prefetch = 0 : i64, scratch_operands = 0 : i64, tpu.core_type = #tpu.core_type<tc>, window_params = [{transform_indices = @transform_0, window_bounds = array<i64: 128, 36>}, {pipeline_mode = #tpu.pipeline_mode<synchronous>, transform_indices = @transform_1, window_bounds = array<i64: 36, 64>}, {pipeline_mode = #tpu.pipeline_mode<synchronous>, transform_indices = @transform_2, window_bounds = array<i64: 1, 64>}, {transform_indices = @transform_3, window_bounds = array<i64: 128, 64>}]} {
    %c0 = arith.constant 0 : index
    %c0_0 = arith.constant 0 : index
    %0 = vector.load %arg1[%c0, %c0_0] : memref<128x36xbf16, #tpu.memory_space<vmem>>, vector<128x36xbf16>
    %c0_1 = arith.constant 0 : index
    %c0_2 = arith.constant 0 : index
    %1 = vector.load %arg2[%c0_1, %c0_2] : memref<36x64xbf16, #tpu.memory_space<vmem>>, vector<36x64xbf16>
    %cst = arith.constant dense<0.000000e+00> : vector<128x64xf32>
    %2 = tpu.matmul %0, %1, %cst {dimension_numbers = #tpu.dot_dimension_numbers<[1], [0], [0], [1], [0, 0, 1, 1], [], []>} : vector<128x36xbf16>, vector<36x64xbf16>, vector<128x64xf32> -> vector<128x64xf32>
    %c0_3 = arith.constant 0 : index
    %c0_4 = arith.constant 0 : index
    %3 = vector.load %arg3[%c0_3, %c0_4] : memref<1x64xf32, #tpu.memory_space<vmem>>, vector<1x64xf32>
    %4 = vector.broadcast %3 : vector<1x64xf32> to vector<128x64xf32>
    %5 = arith.addf %2, %4 : vector<128x64xf32>
    %c0_5 = arith.constant 0 : index
    %c0_6 = arith.constant 0 : index
    %6 = vector.load %arg4[%c0_5, %c0_6] : memref<128x64xf32, #tpu.memory_space<vmem>>, vector<128x64xf32>
    tpu.vector_store %arg4[%c0_5, %c0_6], %5 {strides = array<i32>} : memref<128x64xf32, #tpu.memory_space<vmem>>, vector<128x64xf32>,
    return
  }
  func.func @transform_0(%arg0: i32) -> (i32, i32) {
    %c0_i32 = arith.constant 0 : i32
    %c0_i32_0 = arith.constant 0 : i32
    return %arg0, %c0_i32 : i32, i32
  }
  func.func @transform_1(%arg0: i32) -> (i32, i32) {
    %c0_i32 = arith.constant 0 : i32
    %c0_i32_0 = arith.constant 0 : i32
    %c0_i32_1 = arith.constant 0 : i32
    return %c0_i32, %c0_i32_0 : i32, i32
  }
  func.func @transform_2(%arg0: i32) -> (i32, i32) {
    %c0_i32 = arith.constant 0 : i32
    %c0_i32_0 = arith.constant 0 : i32
    %c0_i32_1 = arith.constant 0 : i32
    return %c0_i32, %c0_i32_0 : i32, i32
  }
  func.func @transform_3(%arg0: i32) -> (i32, i32) {
    %c0_i32 = arith.constant 0 : i32
    %c0_i32_0 = arith.constant 0 : i32
    return %arg0, %c0_i32 : i32, i32
  }
}

</mosaic_0001>

<llo_original>
// kernel: tpu_custom_call.1
$region0: #{tpu_custom_call.1}
  #allocation0 [shape = 'u32[]', space=smem, size = 0x4, offset = 0x4, fixed_abs, tag = 'smem constant byte address 0x4 - core index']
  #allocation1 [shape = 'u32[144,128]{1,0:T(1,128)}', space=vmem, size = 0x12000, scoped, tag = 'internal scratch']
  %s0 = inlined_call_operand.vmem [shape: bf16[512,36], index: 0, kind: input, shape index: {}]
  %s1 = inlined_call_operand.vmem [shape: bf16[36,64], index: 1, kind: input, shape index: {}]
  %s2 = inlined_call_operand.vmem [shape: f32[1,64], index: 2, kind: input, shape index: {}]
  %s3 = inlined_call_operand.vmem [shape: f32[512,64], index: 3, kind: output, shape index: {}]
  %s4 = sld [smem:[#allocation0]]
  $region45: #{tpu_custom_call.1} parent=0
    _
  %s6 = ssub.s32 1, %s4
  %s7 = scalar_select 0, %s6, %s4
  loop: start=0, step=1, limit=6
  $region2: #{tpu_custom_call.1} parent=0 // loop_pre_header
    _
  $region3: #{tpu_custom_call.1} parent=0 // loop_header
    %s9 = sphi 0, %s13
    %p10 = scmp.ge.s32.totalorder %s9, 6
    %s19 = sphi 0, %s21
    %s22 = sphi 0, %s19
    %s23 = sphi 0, %s22
    %s39 = sphi 0, %s23
    %s43 = sphi 0, %s43
    %s45 = sphi 0, %s43
    %s46 = sphi 0, %s45
    %s60 = sphi 0, %s46
    %s64 = sphi 0, %s64
    %s66 = sphi 0, %s64
    %s67 = sphi 0, %s66
    %s81 = sphi 0, %s67
    %s87 = sphi 0, %s89
    %s90 = sphi 0, %s87
    %s91 = sphi 0, %s90
    %s107 = sphi 0, %s91
  $region4: #{tpu_custom_call.1} parent=0 // loop_header_branch
    %12 = sbr.rel (%p10) target = $region8
  $region5: #{tpu_custom_call.1} parent=0 // loop_body
    %s14 = ssub.s32 %s9, 1
    %s15 = ssub.s32 %s9, 2
    %s16 = sadd.s32 %s9, 1
    %s17 = ssub.s32 %s9, %s16
    %p18 = scmp.eq.s32.totalorder %s17, 0
    %s20 = sadd.s32 %s19, 1
    %s21 = scalar_select %p18, %s19, %s20
    %p24 = pneg %p18
    %p25 = scmp.eq.s32.totalorder %s9, 3
    %p26 = por %p24, %p25
    %p27 = scmp.ne.s32.totalorder %s19, %s22
    %p28 = scmp.eq.s32.totalorder %s9, 0
    %p29 = por %p27, %p28
    %p30 = scmp.ne.s32.totalorder %s19, %s22
    %p31 = scmp.eq.s32.totalorder %s14, 3
    %p32 = por %p30, %p31
    %p33 = scmp.ne.s32.totalorder %s22, %s23
    %p34 = scmp.eq.s32.totalorder %s14, 0
    %p35 = por %p33, %p34
    %p36 = scmp.ne.s32.totalorder %s22, %s23
    %p37 = scmp.eq.s32.totalorder %s15, 3
    %p38 = por %p36, %p37
    %p40 = scmp.ne.s32.totalorder %s23, %s39
    %p41 = scmp.eq.s32.totalorder %s15, 0
    %p42 = por %p40, %p41
    %s44 = sadd.s32 %s43, 1
    %p47 = scmp.eq.s32.totalorder %s9, 3
    %p48 = scmp.ne.s32.totalorder %s43, %s45
    %p49 = scmp.eq.s32.totalorder %s9, 0
    %p50 = por %p48, %p49
    %p51 = scmp.ne.s32.totalorder %s43, %s45
    %p52 = scmp.eq.s32.totalorder %s14, 3
    %p53 = por %p51, %p52
    %p54 = scmp.ne.s32.totalorder %s45, %s46
    %p55 = scmp.eq.s32.totalorder %s14, 0
    %p56 = por %p54, %p55
    %p57 = scmp.ne.s32.totalorder %s45, %s46
    %p58 = scmp.eq.s32.totalorder %s15, 3
    %p59 = por %p57, %p58
    %p61 = scmp.ne.s32.totalorder %s46, %s60
    %p62 = scmp.eq.s32.totalorder %s15, 0
    %p63 = por %p61, %p62
    %s65 = sadd.s32 %s64, 1
    %p68 = scmp.eq.s32.totalorder %s9, 3
    %p69 = scmp.ne.s32.totalorder %s64, %s66
    %p70 = scmp.eq.s32.totalorder %s9, 0
    %p71 = por %p69, %p70
    %p72 = scmp.ne.s32.totalorder %s64, %s66
    %p73 = scmp.eq.s32.totalorder %s14, 3
    %p74 = por %p72, %p73
    %p75 = scmp.ne.s32.totalorder %s66, %s67
    %p76 = scmp.eq.s32.totalorder %s14, 0
    %p77 = por %p75, %p76
    %p78 = scmp.ne.s32.totalorder %s66, %s67
    %p79 = scmp.eq.s32.totalorder %s15, 3
    %p80 = por %p78, %p79
    %p82 = scmp.ne.s32.totalorder %s67, %s81
    %p83 = scmp.eq.s32.totalorder %s15, 0
    %p84 = por %p82, %p83
    %s85 = ssub.s32 %s9, %s16
    %p86 = scmp.eq.s32.totalorder %s85, 0
    %s88 = sadd.s32 %s87, 1
    %s89 = scalar_select %p86, %s87, %s88
    %p92 = pneg %p86
    %p93 = scmp.eq.s32.totalorder %s9, 3
    %p94 = por %p92, %p93
    %p95 = scmp.ne.s32.totalorder %s87, %s90
    %p96 = scmp.eq.s32.totalorder %s9, 0
    %p97 = por %p95, %p96
    %p98 = scmp.ne.s32.totalorder %s87, %s90
    %p99 = scmp.eq.s32.totalorder %s14, 3
    %p100 = por %p98, %p99
    %p101 = scmp.ne.s32.totalorder %s90, %s91
    %p102 = scmp.eq.s32.totalorder %s14, 0
    %p103 = por %p101, %p102
    %p104 = scmp.ne.s32.totalorder %s90, %s91
    %p105 = scmp.eq.s32.totalorder %s15, 3
    %p106 = por %p104, %p105
    %p108 = scmp.ne.s32.totalorder %s91, %s107
    %p109 = scmp.eq.s32.totalorder %s15, 0
    %p110 = por %p108, %p109
    %p111 = scmp.le.s32.totalorder 1, %s9
    %p112 = scmp.lt.s32.totalorder %s9, 5
    %p113 = pnand %p111, %p112
    %p114 = pneg %p113
    // Predicated region
    $region9: #{tpu_custom_call.1} parent=5 // pred_check
      _
    $region10: #{tpu_custom_call.1} parent=5 // pred_check_branch
      %116 = sbr.rel (%p113) target = $region12
    $region11: #{tpu_custom_call.1} parent=5 // pred_region
      %s117 = ssub.s32 %s9, 1
      // Predicated region
      $region13: #{tpu_custom_call.1} parent=11 // pred_check
        %p118 = pneg %p56
      $region14: #{tpu_custom_call.1} parent=11 // pred_check_branch
        %120 = sbr.rel (%p118) target = $region16
      $region15: #{tpu_custom_call.1} parent=11 // pred_region
        _
      $region16: #{tpu_custom_call.1} parent=11 // pred_fallthru
        _
      // Predicated region
      $region17: #{tpu_custom_call.1} parent=11 // pred_check
        %p121 = pneg %p77
      $region18: #{tpu_custom_call.1} parent=11 // pred_check_branch
        %123 = sbr.rel (%p121) target = $region20
      $region19: #{tpu_custom_call.1} parent=11 // pred_region
        _
      $region20: #{tpu_custom_call.1} parent=11 // pred_fallthru
        _
    $region12: #{tpu_custom_call.1} parent=5 // pred_fallthru
      _
    %p124 = scmp.lt.s32.totalorder %s9, 4
    // Predicated region
    $region21: #{tpu_custom_call.1} parent=5 // pred_check
      %p125 = pneg %p124
    $region22: #{tpu_custom_call.1} parent=5 // pred_check_branch
      %127 = sbr.rel (%p125) target = $region24
    $region23: #{tpu_custom_call.1} parent=5 // pred_region
      // Predicated region
      $region25: #{tpu_custom_call.1} parent=23 // pred_check
        %p128 = pneg %p29
      $region26: #{tpu_custom_call.1} parent=23 // pred_check_branch
        %130 = sbr.rel (%p128) target = $region28
      $region27: #{tpu_custom_call.1} parent=23 // pred_region
        %s131 = smul.u32 16, %s9
        %p132 = scmp.lt.s32.totalorder %s131, 63
        %s133 = scalar_select %p132, %s131, 63
        %s134 = smul.addr %s133, 4
        %s135 = scalar_lea.vmem %s0, %s134
        %s136 = smul.u32 16, %s9
      $region28: #{tpu_custom_call.1} parent=23 // pred_fallthru
        _
    $region24: #{tpu_custom_call.1} parent=5 // pred_fallthru
      _
    %p137 = scmp.le.s32.totalorder 1, %s9
    %p138 = scmp.lt.s32.totalorder %s9, 5
    %p139 = pnand %p137, %p138
    %p140 = pneg %p139
    // Predicated region
    $region29: #{tpu_custom_call.1} parent=5 // pred_check
      _
    $region30: #{tpu_custom_call.1} parent=5 // pred_check_branch
      %142 = sbr.rel (%p139) target = $region32
    $region31: #{tpu_custom_call.1} parent=5 // pred_region
      %s143 = ssub.s32 %s9, 1
      %s144 = smul.u32 16, %s14
      %p145 = scmp.lt.s32.totalorder %s144, 63
      %s146 = scalar_select %p145, %s144, 63
      %s147 = smul.addr %s146, 4
      %s148 = scalar_lea.vmem %s0, %s147
      %p149 = pneg %p35
      %p150 = pneg %p32
      %p151 = pneg %p56
      %p152 = pneg %p53
      %p153 = pneg %p77
      %p154 = pneg %p74
      %p155 = pneg %p103
      %p156 = pneg %p100
      %s157 = smul.u32 16, %s14
      %p158 = scmp.lt.s32.totalorder %s157, 63
      %s159 = scalar_select %p158, %s157, 63
      %s160 = smul.addr %s159, 8
      %s161 = scalar_lea.vmem %s3, %s160
      %s162 = smul.u32 16, %s14
      %p163 = scmp.lt.s32.totalorder %s162, 63
      %s164 = scalar_select %p163, %s162, 63
      %s165 = smul.addr %s164, 4
      %s166 = scalar_lea.vmem %s0, %s165
      %s167 = smul.u32 16, %s14
      %s168 = smul.u32 16, %s14
      %p169 = scmp.lt.s32.totalorder %s168, 63
      %s170 = scalar_select %p169, %s168, 63
      %s171 = smul.addr %s170, 8
      %s172 = scalar_lea.vmem %s3, %s171
      %s173 = smul.u32 16, %s14
      %v175 = vld [vmem:[%s166] sm:$0xf]
      %v176 = vld [vmem:[%s166 + $0x4] sm:$0xf]
      %v177 = vld [vmem:[%s166 + $0x8] sm:$0xf]
      %v178 = vld [vmem:[%s166 + $0xc] sm:$0xf]
      %v179 = vld [vmem:[%s166 + $0x10] sm:$0xf]
      %v180 = vld [vmem:[%s166 + $0x14] sm:$0xf]
      %v181 = vld [vmem:[%s166 + $0x18] sm:$0xf]
      %v182 = vld [vmem:[%s166 + $0x1c] sm:$0xf]
      %v183 = vld [vmem:[%s166 + $0x20] sm:$0xf]
      %v184 = vld [vmem:[%s166 + $0x24] sm:$0xf]
      %v185 = vld [vmem:[%s166 + $0x28] sm:$0xf]
      %v186 = vld [vmem:[%s166 + $0x2c] sm:$0xf]
      %v187 = vld [vmem:[%s166 + $0x30] sm:$0xf]
      %v188 = vld [vmem:[%s166 + $0x34] sm:$0xf]
      %v189 = vld [vmem:[%s166 + $0x38] sm:$0xf]
      %v190 = vld [vmem:[%s166 + $0x3c] sm:$0xf]
      %v191 = vld [vmem:[%s1] sm:$0xf]
      %v192 = vld [vmem:[%s1 + $0x4] sm:$0xf]
      %v193 = vld [vmem:[%s1 + $0x8] sm:$0xf]
      %v194 = vld [vmem:[%s1 + $0xc] sm:$0xf]
      %v195 = vld [vmem:[%s1 + $0x10] sm:$0x3]
      %v196 = vld [vmem:[%s2] sm:$0x1]
      %v198 = vlaneseq
      %v199 = vshrl.u32 %v198, 7
      %v200 = vsub.s32 0, %v199
      %v201 = vrot.slane %v196, %v200
      %v219 = vunpack.c.l.b16 %v175
      %v220 = vunpack.c.l.b16 %v176
      %v221 = vunpack.c.l.b16 %v177
      %v222 = vunpack.c.l.b16 %v178
      %v223 = vunpack.c.l.b16 %v179
      %v224 = vunpack.c.l.b16 %v180
      %v225 = vunpack.c.l.b16 %v181
      %v226 = vunpack.c.l.b16 %v182
      %v227 = vunpack.c.l.b16 %v183
      %v228 = vunpack.c.l.b16 %v184
      %v229 = vunpack.c.l.b16 %v185
      %v230 = vunpack.c.l.b16 %v186
      %v231 = vunpack.c.l.b16 %v187
      %v232 = vunpack.c.l.b16 %v188
      %v233 = vunpack.c.l.b16 %v189
      %v234 = vunpack.c.l.b16 %v190
      %v235 = vpack.c.b16 %v220, %v219
      %v236 = vpack.c.b16 %v222, %v221
      %v237 = vpack.c.b16 %v224, %v223
      %v238 = vpack.c.b16 %v226, %v225
      %v239 = vpack.c.b16 %v228, %v227
      %v240 = vpack.c.b16 %v230, %v229
      %v241 = vpack.c.b16 %v232, %v231
      %v242 = vpack.c.b16 %v234, %v233
      %v248 = vunpack.c.l.b16 %v191
      %v249 = vunpack.c.l.b16 %v192
      %v250 = vunpack.c.l.b16 %v193
      %v251 = vunpack.c.l.b16 %v194
      %v252 = vunpack.c.l.b16 %v195
      %v253 = vpack.c.b16 %v249, %v248
      %v254 = vpack.c.b16 %v251, %v250
      %v255 = vpack.c.b16 %v252, %v252
      %vm258 = vcmask 293888
      %v260 = vsel %vm258, %v235, 0
      %v263 = vsel %vm258, %v236, 0
      %v266 = vsel %vm258, %v237, 0
      %v269 = vsel %vm258, %v238, 0
      %v272 = vsel %vm258, %v239, 0
      %v275 = vsel %vm258, %v240, 0
      %v278 = vsel %vm258, %v241, 0
      %v281 = vsel %vm258, %v242, 0
      %vm283 = vcmask 1041408
      %v285 = vsel %vm283, %v255, 0
      %287 = vmatprep.subr.bf16.mxu0 0
      %288 = vmatpush1.bf16.msra.mxu0 0
      %289 = vmatprep.subr.bf16.mxu0 0
      %290 = vmatpush1.bf16.msra.mxu0 0
      %291 = vmatprep.subr.bf16.mxu0 0
      %292 = vmatpush1.bf16.msra.mxu0 0
      %293 = vmatprep.subr.bf16.mxu0 0
      %294 = vmatpush1.bf16.msra.mxu0 0
      %295 = vmatprep.subr.bf16.mxu0 0
      %296 = vmatpush1.bf16.msra.mxu0 0
      %297 = vmatprep.subr.bf16.mxu0 0
      %298 = vmatpush1.bf16.msra.mxu0 %v285
      %299 = vmatprep.subr.bf16.mxu0 0
      %300 = vmatpush1.bf16.msra.mxu0 %v254
      %301 = vmatprep.subr.bf16.mxu0 0
      %302 = vmatpush1.bf16.msra.mxu0 %v253
      %303 = vmatprep.subr.bf16.mxu0 0
      %304 = vmatpush2.bf16.msra.mxu0 0
      %305 = vmatprep.subr.bf16.mxu0 0
      %306 = vmatpush2.bf16.msra.mxu0 0
      %307 = vmatprep.subr.bf16.mxu0 0
      %308 = vmatpush2.bf16.msra.mxu0 0
      %309 = vmatprep.subr.bf16.mxu0 0
      %310 = vmatpush2.bf16.msra.mxu0 0
      %311 = vmatprep.subr.bf16.mxu0 0
      %312 = vmatpush2.bf16.msra.mxu0 0
      %313 = vmatprep.subr.bf16.mxu0 0
      %314 = vmatpush2.bf16.msra.mxu0 0
      %315 = vmatprep.subr.bf16.mxu0 0
      %316 = vmatpush2.bf16.msra.mxu0 0
      %317 = vmatprep.subr.bf16.mxu0 0
      %318 = vmatpush2.bf16.msra.mxu0 0
      %319 = vmatprep.mubr.bf16.mxu0 0
      %320 = vmatmul.mubr.bf16.gmra.mxu0 %v260
      %v321 = vpop.f32.mrf.mxu0
      %v322 = vadd.f32 %v201, %v321
      %v323 = vpop.f32.mrf.mxu0
      %v324 = vpop.f32.mrf.mxu0
      %v325 = vadd.f32 %v201, %v324
      %v326 = vpop.f32.mrf.mxu0
      %327 = vmatprep.mubr.bf16.mxu0 0
      %328 = vmatmul.mubr.bf16.gmra.mxu0 %v263
      %v329 = vpop.f32.mrf.mxu0
      %v330 = vadd.f32 %v201, %v329
      %v331 = vpop.f32.mrf.mxu0
      %v332 = vpop.f32.mrf.mxu0
      %v333 = vadd.f32 %v201, %v332
      %v334 = vpop.f32.mrf.mxu0
      %335 = vmatprep.mubr.bf16.mxu0 0
      %336 = vmatmul.mubr.bf16.gmra.mxu0 %v266
      %v337 = vpop.f32.mrf.mxu0
      %v338 = vadd.f32 %v201, %v337
      %v339 = vpop.f32.mrf.mxu0
      %v340 = vpop.f32.mrf.mxu0
      %v341 = vadd.f32 %v201, %v340
      %v342 = vpop.f32.mrf.mxu0
      %343 = vmatprep.mubr.bf16.mxu0 0
      %344 = vmatmul.mubr.bf16.gmra.mxu0 %v269
      %v345 = vpop.f32.mrf.mxu0
      %v346 = vadd.f32 %v201, %v345
      %v347 = vpop.f32.mrf.mxu0
      %v348 = vpop.f32.mrf.mxu0
      %v349 = vadd.f32 %v201, %v348
      %v350 = vpop.f32.mrf.mxu0
      %351 = vmatprep.mubr.bf16.mxu0 0
      %352 = vmatmul.mubr.bf16.gmra.mxu0 %v272
      %v353 = vpop.f32.mrf.mxu0
      %v354 = vadd.f32 %v201, %v353
      %v355 = vpop.f32.mrf.mxu0
      %v356 = vpop.f32.mrf.mxu0
      %v357 = vadd.f32 %v201, %v356
      %v358 = vpop.f32.mrf.mxu0
      %359 = vmatprep.mubr.bf16.mxu0 0
      %360 = vmatmul.mubr.bf16.gmra.mxu0 %v275
      %v361 = vpop.f32.mrf.mxu0
      %v362 = vadd.f32 %v201, %v361
      %v363 = vpop.f32.mrf.mxu0
      %v364 = vpop.f32.mrf.mxu0
      %v365 = vadd.f32 %v201, %v364
      %v366 = vpop.f32.mrf.mxu0
      %367 = vmatprep.mubr.bf16.mxu0 0
      %368 = vmatmul.mubr.bf16.gmra.mxu0 %v278
      %v369 = vpop.f32.mrf.mxu0
      %v370 = vadd.f32 %v201, %v369
      %v371 = vpop.f32.mrf.mxu0
      %v372 = vpop.f32.mrf.mxu0
      %v373 = vadd.f32 %v201, %v372
      %v374 = vpop.f32.mrf.mxu0
      %375 = vmatprep.mubr.bf16.mxu0 0
      %376 = vmatmul.mubr.bf16.gmra.mxu0 %v281
      %v377 = vpop.f32.mrf.mxu0
      %v378 = vadd.f32 %v201, %v377
      %v379 = vpop.f32.mrf.mxu0
      %v380 = vpop.f32.mrf.mxu0
      %v381 = vadd.f32 %v201, %v380
      %v382 = vpop.f32.mrf.mxu0
      %383 = vdwg.mxu0
      %vm384 = vcmask 523264
      %385 = vst.msk [vmem:[%s172] sm:$0xff] %vm384, %v322
      %386 = vst.msk [vmem:[%s172 + $0x8] sm:$0xff] %vm384, %v325
      %387 = vst.msk [vmem:[%s172 + $0x10] sm:$0xff] %vm384, %v330
      %388 = vst.msk [vmem:[%s172 + $0x18] sm:$0xff] %vm384, %v333
      %389 = vst.msk [vmem:[%s172 + $0x20] sm:$0xff] %vm384, %v338
      %390 = vst.msk [vmem:[%s172 + $0x28] sm:$0xff] %vm384, %v341
      %391 = vst.msk [vmem:[%s172 + $0x30] sm:$0xff] %vm384, %v346
      %392 = vst.msk [vmem:[%s172 + $0x38] sm:$0xff] %vm384, %v349
      %393 = vst.msk [vmem:[%s172 + $0x40] sm:$0xff] %vm384, %v354
      %394 = vst.msk [vmem:[%s172 + $0x48] sm:$0xff] %vm384, %v357
      %395 = vst.msk [vmem:[%s172 + $0x50] sm:$0xff] %vm384, %v362
      %396 = vst.msk [vmem:[%s172 + $0x58] sm:$0xff] %vm384, %v365
      %397 = vst.msk [vmem:[%s172 + $0x60] sm:$0xff] %vm384, %v370
      %398 = vst.msk [vmem:[%s172 + $0x68] sm:$0xff] %vm384, %v373
      %399 = vst.msk [vmem:[%s172 + $0x70] sm:$0xff] %vm384, %v378
      %400 = vst.msk [vmem:[%s172 + $0x78] sm:$0xff] %vm384, %v381
      %s401 = smul.u32 16, %s14
      %p402 = scmp.lt.s32.totalorder %s401, 63
      %s403 = scalar_select %p402, %s401, 63
      %s404 = smul.addr %s403, 8
      %s405 = scalar_lea.vmem %s3, %s404
      // Predicated region
      $region33: #{tpu_custom_call.1} parent=31 // pred_check
        %p406 = pneg %p100
      $region34: #{tpu_custom_call.1} parent=31 // pred_check_branch
        %408 = sbr.rel (%p406) target = $region36
      $region35: #{tpu_custom_call.1} parent=31 // pred_region
        %s409 = smul.u32 16, %s14
      $region36: #{tpu_custom_call.1} parent=31 // pred_fallthru
        _
    $region32: #{tpu_custom_call.1} parent=5 // pred_fallthru
      _
    %p410 = scmp.le.s32.totalorder 2, %s9
    // Predicated region
    $region37: #{tpu_custom_call.1} parent=5 // pred_check
      %p411 = pneg %p410
    $region38: #{tpu_custom_call.1} parent=5 // pred_check_branch
      %413 = sbr.rel (%p411) target = $region40
    $region39: #{tpu_custom_call.1} parent=5 // pred_region
      %s414 = ssub.s32 %s9, 2
      // Predicated region
      $region41: #{tpu_custom_call.1} parent=39 // pred_check
        %p415 = pneg %p106
      $region42: #{tpu_custom_call.1} parent=39 // pred_check_branch
        %417 = sbr.rel (%p415) target = $region44
      $region43: #{tpu_custom_call.1} parent=39 // pred_region
        %s418 = smul.u32 16, %s15
        %p419 = scmp.lt.s32.totalorder %s418, 63
        %s420 = scalar_select %p419, %s418, 63
        %s421 = smul.addr %s420, 8
        %s422 = scalar_lea.vmem %s3, %s421
      $region44: #{tpu_custom_call.1} parent=39 // pred_fallthru
        _
    $region40: #{tpu_custom_call.1} parent=5 // pred_fallthru
      _
  $region6: #{tpu_custom_call.1} parent=0 // loop_footer
    %s13 = sadd.s32 1, %s9
  $region7: #{tpu_custom_call.1} parent=0 // loop_footer_branch
    %8 = sbr.rel target = $region3
  $region8: #{tpu_custom_call.1} parent=0 // loop_exit
    _

</llo_original>
